<compile_context>
chip_gen: v7x
topology: tpu7x:2x2x1
jax: 0.10.0
libtpu: 0.0.40
codegen_flags: <defaults>
</compile_context>

<pallas_src>
import jax
import jax.numpy as jnp
from jax.experimental import pallas as pl
from jax.experimental.pallas import tpu as pltpu


# ----------------------------------------------------------------------------
# Kernel
# ----------------------------------------------------------------------------
def _compose_kernel(x_ref, w1_ref, b1_ref, w2_ref, b2_ref, y1_ref, y2_ref):
    # first: h = x @ W1 + b1  (f32 MXU accumulation, f32 bias add on the VPU;
    # v5e has no bf16 VALU so the add stays in f32 regardless of I/O dtype).
    h = jnp.dot(x_ref[...], w1_ref[...], preferred_element_type=jnp.float32)
    h = h + b1_ref[...].astype(jnp.float32)

    # Cache first_out (single cast).  The second matmul consumes this exact
    # stored value, mirroring `x = self.second(self.first_out)` in torch.
    h_cast = h.astype(y1_ref.dtype)
    y1_ref[...] = h_cast

    # second: y = first_out @ W2 + b2
    y = jnp.dot(h_cast, w2_ref[...], preferred_element_type=jnp.float32)
    y = y + b2_ref[...].astype(jnp.float32)
    y2_ref[...] = y.astype(y2_ref.dtype)


# ----------------------------------------------------------------------------
# Helpers
# ----------------------------------------------------------------------------
def _round_up(x, m):
    return ((x + m - 1) // m) * m


def _sublane_packing(dtype):
    # f32 -> 8 rows/vreg, bf16 -> 16, int8/fp8 -> 32 (sub-32-bit packs sublanes).
    return max(8, 32 // jnp.dtype(dtype).itemsize)


def _pad2d(a, rows, cols):
    r, c = a.shape
    if r == rows and c == cols:
        return a
    return jnp.pad(a, ((0, rows - r), (0, cols - c)))


def _vmem_capacity_bytes():
    """Physical VMEM of the local TPU generation (fallback: v7x's 64 MiB)."""
    try:
        cap = getattr(pltpu.get_tpu_info(), "vmem_capacity_bytes", None)
        if cap:
            return int(cap)
    except Exception:
        pass
    return 64 * 1024 * 1024


def _choose_tile_n(n, d_in_p, d_hid_p, d_out_p, dtype, budget_bytes):
    """Largest row tile that fits the VMEM budget, rounded to MXU/sublane
    friendly sizes, clamped so the grid has >=2 steps when N allows (so both
    v7x TensorCores get work on the "parallel" row axis)."""
    itemsize = jnp.dtype(dtype).itemsize
    packing = _sublane_packing(dtype)

    # Resident weights/biases: single-buffered (memory_space=VMEM specs).
    weight_bytes = itemsize * (d_in_p * d_hid_p + d_hid_p * d_out_p
                               + d_hid_p + d_out_p)
    # Per row: double-buffered x / y1 / y2 pipeline tiles + the in-kernel f32
    # temporaries (h and y stay f32 even for bf16 I/O) + the cached cast of h.
    per_row = (2 * itemsize * (d_in_p + d_hid_p + d_out_p)
               + 4 * (d_hid_p + d_out_p)
               + itemsize * d_hid_p)

    avail = max(budget_bytes - weight_bytes, packing * per_row)
    tile = min(1024, avail // per_row)

    # Ensure >=2 grid steps when N is big enough (v7x has 2 TCs on this axis).
    if n >= 2 * packing:
        tile = min(tile, _round_up(-(-n // 2), packing))
    tile = min(tile, _round_up(n, packing))

    # Prefer 256-multiples (v6e/v7x 256x256 MXU cadence), then 128 (v5e MXUs),
    # else the dtype's sublane packing.
    for m in (256, 128, packing):
        if tile >= m:
            tile = (tile // m) * m
            break
    return int(max(packing, tile))


# ----------------------------------------------------------------------------
# Wrapper (weights already lane-padded; x rows are NOT padded)
# ----------------------------------------------------------------------------
def _compose_call(x, w1_p, b1_p, w2_p, b2_p, d_hid, d_out, *, tile_n=None):
    n, d_in = x.shape
    d_in_p, d_hid_p = w1_p.shape
    d_out_p = w2_p.shape[1]
    dtype = x.dtype
    itemsize = jnp.dtype(dtype).itemsize
    packing = _sublane_packing(dtype)

    cap = _vmem_capacity_bytes()
    budget = int(cap * 0.65)
    vmem_limit = int(min(cap, budget + (16 << 20)))

    if tile_n is None:
        tile_n = _choose_tile_n(n, d_in_p, d_hid_p, d_out_p, dtype, budget)
    else:
        tile_n = max(packing, (int(tile_n) // packing) * packing)
        tile_n = min(tile_n, _round_up(n, packing))

    # Only the feature (lane) dims get zero-padded; rows are left as-is and the
    # last grid step is a partial block that Pallas masks on read/writeback.
    x_p = _pad2d(x, n, d_in_p)

    grid = (pl.cdiv(n, tile_n),)

    flops = 2 * n * (d_in_p * d_hid_p + d_hid_p * d_out_p)
    bytes_accessed = itemsize * (
        n * (d_in_p + d_hid_p + d_out_p)
        + d_in_p * d_hid_p + d_hid_p * d_out_p + d_hid_p + d_out_p)

    # Resident operands: whole array in VMEM, single copy, no double-buffering.
    resident = pl.BlockSpec(memory_space=pltpu.MemorySpace.VMEM)

    y1_p, y2_p = pl.pallas_call(
        _compose_kernel,
        out_shape=(
            jax.ShapeDtypeStruct((n, d_hid_p), dtype),
            jax.ShapeDtypeStruct((n, d_out_p), dtype),
        ),
        grid=grid,
        in_specs=[
            # x: row-tiled, software-pipelined across the grid.
            pl.BlockSpec((tile_n, d_in_p), lambda i: (i, 0)),
            resident,   # W1
            resident,   # b1
            resident,   # W2
            resident,   # b2
        ],
        out_specs=(
            pl.BlockSpec((tile_n, d_hid_p), lambda i: (i, 0)),
            pl.BlockSpec((tile_n, d_out_p), lambda i: (i, 0)),
        ),
        compiler_params=pltpu.CompilerParams(
            dimension_semantics=("parallel",),
            vmem_limit_bytes=vmem_limit,
        ),
        cost_estimate=pl.CostEstimate(
            flops=int(flops),
            bytes_accessed=int(bytes_accessed),
            transcendentals=0,
        ),
    )(x_p, w1_p, b1_p, w2_p, b2_p)

    return y1_p[:, :d_hid], y2_p[:, :d_out]


def compose_forward(x, w1, b1, w2, b2, *, tile_n=None):
    """Standalone fused forward (pads the weights on every call; prefer the
    CustomCompose class which pads them once at construction)."""
    d_in, d_hid = w1.shape
    d_out = w2.shape[1]
    d_in_p = _round_up(d_in, 128)
    d_hid_p = _round_up(d_hid, 128)
    d_out_p = _round_up(d_out, 128)
    w1_p = _pad2d(w1, d_in_p, d_hid_p)
    b1_p = _pad2d(jnp.reshape(b1, (1, -1)), 1, d_hid_p)
    w2_p = _pad2d(w2, d_hid_p, d_out_p)
    b2_p = _pad2d(jnp.reshape(b2, (1, -1)), 1, d_out_p)
    return _compose_call(x, w1_p, b1_p, w2_p, b2_p, d_hid, d_out, tile_n=tile_n)


class CustomCompose:
    """JAX/Pallas port of the PyTorch CustomCompose wrapper.

    `first` / `second` are parameter bundles for linear maps; the composed
    forward runs fused inside a single pipelined Pallas TPU kernel and both
    intermediate results are cached exactly like the torch module does.
    Static weights/biases are lane-padded (multiples of 128) once here.
    """

    def __init__(self, first, second):
        self.first = first      # {"irreps_in", "w": (D_in, D_hid), "b": (1, D_hid)}
        self.second = second    # {"irreps_out", "w": (D_hid, D_out), "b": (1, D_out)}
        self.irreps_in = first["irreps_in"]
        self.irreps_out = second["irreps_out"]

        w1, b1 = first["w"], first["b"]
        w2, b2 = second["w"], second["b"]
        self._d_hid = int(w1.shape[1])
        self._d_out = int(w2.shape[1])
        d_in_p = _round_up(w1.shape[0], 128)
        d_hid_p = _round_up(self._d_hid, 128)
        d_out_p = _round_up(self._d_out, 128)
        # Pad ONCE (lane-dense, unmasked stores, full MXU columns).  If model
        # precision allows, casting these (and x) to bf16 here is a further
        # 2-4x MXU / DMA win on v6e/v7x; kept at the caller's dtype to match
        # the torch module's numerics.
        self._w1_p = _pad2d(w1, d_in_p, d_hid_p)
        self._b1_p = _pad2d(jnp.reshape(b1, (1, -1)), 1, d_hid_p)
        self._w2_p = _pad2d(w2, d_hid_p, d_out_p)
        self._b2_p = _pad2d(jnp.reshape(b2, (1, -1)), 1, d_out_p)

        self.first_out = None
        self.second_out = None

    def __call__(self, x, *, tile_n=None):
        y1, y2 = _compose_call(
            x, self._w1_p, self._b1_p, self._w2_p, self._b2_p,
            self._d_hid, self._d_out, tile_n=tile_n,
        )
        self.first_out = y1     # mirrors `self.first_out = x.clone()`
        self.second_out = y2    # mirrors `self.second_out = x.clone()`
        return y2


# ----------------------------------------------------------------------------
# Self-test
# ----------------------------------------------------------------------------
if __name__ == "__main__":
    key = jax.random.PRNGKey(0)
    k_x, k_w1, k_b1, k_w2, k_b2 = jax.random.split(key, 5)

    # Small shapes consistent with the module.  N=24 so the forced tile (8)
    # exercises a 3-step pipelined grid and the auto tile (16) exercises a
    # 2-step grid with a partial (masked) edge block; feature dims < 128
    # exercise the lane-dense padding path.
    N, D_IN, D_HID, D_OUT = 24, 32, 48, 32

    x = jax.random.normal(k_x, (N, D_IN), dtype=jnp.float32)
    first = {
        "irreps_in": D_IN,
        "w": jax.random.normal(k_w1, (D_IN, D_HID), dtype=jnp.float32) * 0.1,
        "b": jax.random.normal(k_b1, (1, D_HID), dtype=jnp.float32) * 0.1,
    }
    second = {
        "irreps_out": D_OUT,
        "w": jax.random.normal(k_w2, (D_HID, D_OUT), dtype=jnp.float32) * 0.1,
        "b": jax.random.normal(k_b2, (1, D_OUT), dtype=jnp.float32) * 0.1,
    }

    model = CustomCompose(first, second)

    # Forced tile_n=8 -> 3-step grid (tests the pipelined multi-step path).
    y = model(x, tile_n=8)
    jax.block_until_ready(y)
    jax.block_until_ready(model.first_out)

    # Pure-JAX reference of the composed forward.
    h_ref = x @ first["w"] + first["b"]
    y_ref = h_ref @ second["w"] + second["b"]
    assert model.first_out.shape == (N, D_HID)
    assert y.shape == (N, D_OUT)
    assert jnp.allclose(model.first_out, h_ref, atol=1e-5, rtol=1e-5)
    assert jnp.allclose(y, y_ref, atol=1e-5, rtol=1e-5)

    # Auto tile (>=2 grid steps, partial last block -> masked edge handling).
    y_auto = model(x)
    jax.block_until_ready(y_auto)
    assert jnp.allclose(y_auto, y_ref, atol=1e-5, rtol=1e-5)
    assert jnp.allclose(model.first_out, h_ref, atol=1e-5, rtol=1e-5)

    # Standalone convenience wrapper path.
    y1_s, y2_s = compose_forward(x, first["w"], first["b"],
                                 second["w"], second["b"])
    jax.block_until_ready(y2_s)
    assert jnp.allclose(y1_s, h_ref, atol=1e-5, rtol=1e-5)
    assert jnp.allclose(y2_s, y_ref, atol=1e-5, rtol=1e-5)

    print("KERNEL_OK")
</pallas_src>

<mosaic_0001>
module attributes {stable_mosaic.version = 11 : i64} {
  func.func @_compose_kernel(%arg0: i32, %arg1: memref<8x128xf32, #tpu.memory_space<vmem>>, %arg2: memref<128x128xf32, #tpu.memory_space<vmem>>, %arg3: memref<1x128xf32, #tpu.memory_space<vmem>>, %arg4: memref<128x128xf32, #tpu.memory_space<vmem>>, %arg5: memref<1x128xf32, #tpu.memory_space<vmem>>, %arg6: memref<8x128xf32, #tpu.memory_space<vmem>>, %arg7: memref<8x128xf32, #tpu.memory_space<vmem>>) attributes {dimension_semantics = [#tpu.dimension_semantics<parallel>], iteration_bounds = array<i64: 3>, scalar_prefetch = 0 : i64, scratch_operands = 0 : i64, tpu.core_type = #tpu.core_type<tc>, window_params = [{transform_indices = @transform_0, window_bounds = array<i64: 8, 128>}, {pipeline_mode = #tpu.pipeline_mode<synchronous>, transform_indices = @transform_1, window_bounds = array<i64: 128, 128>}, {pipeline_mode = #tpu.pipeline_mode<synchronous>, transform_indices = @transform_2, window_bounds = array<i64: 1, 128>}, {pipeline_mode = #tpu.pipeline_mode<synchronous>, transform_indices = @transform_3, window_bounds = array<i64: 128, 128>}, {pipeline_mode = #tpu.pipeline_mode<synchronous>, transform_indices = @transform_4, window_bounds = array<i64: 1, 128>}, {transform_indices = @transform_5, window_bounds = array<i64: 8, 128>}, {transform_indices = @transform_6, window_bounds = array<i64: 8, 128>}]} {
    %c0 = arith.constant 0 : index
    %c0_0 = arith.constant 0 : index
    %0 = vector.load %arg1[%c0, %c0_0] : memref<8x128xf32, #tpu.memory_space<vmem>>, vector<8x128xf32>
    %c0_1 = arith.constant 0 : index
    %c0_2 = arith.constant 0 : index
    %1 = vector.load %arg2[%c0_1, %c0_2] : memref<128x128xf32, #tpu.memory_space<vmem>>, vector<128x128xf32>
    %cst = arith.constant dense<0.000000e+00> : vector<8x128xf32>
    %2 = tpu.matmul %0, %1, %cst {dimension_numbers = #tpu.dot_dimension_numbers<[1], [0], [0], [1], [0, 0, 1, 1], [], []>} : vector<8x128xf32>, vector<128x128xf32>, vector<8x128xf32> -> vector<8x128xf32>
    %c0_3 = arith.constant 0 : index
    %c0_4 = arith.constant 0 : index
    %3 = vector.load %arg3[%c0_3, %c0_4] : memref<1x128xf32, #tpu.memory_space<vmem>>, vector<1x128xf32>
    %4 = vector.broadcast %3 : vector<1x128xf32> to vector<8x128xf32>
    %5 = arith.addf %2, %4 : vector<8x128xf32>
    %c0_5 = arith.constant 0 : index
    %c0_6 = arith.constant 0 : index
    %6 = vector.load %arg6[%c0_5, %c0_6] : memref<8x128xf32, #tpu.memory_space<vmem>>, vector<8x128xf32>
    tpu.vector_store %arg6[%c0_5, %c0_6], %5 {strides = array<i32>} : memref<8x128xf32, #tpu.memory_space<vmem>>, vector<8x128xf32>,
    %c0_7 = arith.constant 0 : index
    %c0_8 = arith.constant 0 : index
    %7 = vector.load %arg4[%c0_7, %c0_8] : memref<128x128xf32, #tpu.memory_space<vmem>>, vector<128x128xf32>
    %cst_9 = arith.constant dense<0.000000e+00> : vector<8x128xf32>
    %8 = tpu.matmul %5, %7, %cst_9 {dimension_numbers = #tpu.dot_dimension_numbers<[1], [0], [0], [1], [0, 0, 1, 1], [], []>} : vector<8x128xf32>, vector<128x128xf32>, vector<8x128xf32> -> vector<8x128xf32>
    %c0_10 = arith.constant 0 : index
    %c0_11 = arith.constant 0 : index
    %9 = vector.load %arg5[%c0_10, %c0_11] : memref<1x128xf32, #tpu.memory_space<vmem>>, vector<1x128xf32>
    %10 = vector.broadcast %9 : vector<1x128xf32> to vector<8x128xf32>
    %11 = arith.addf %8, %10 : vector<8x128xf32>
    %c0_12 = arith.constant 0 : index
    %c0_13 = arith.constant 0 : index
    %12 = vector.load %arg7[%c0_12, %c0_13] : memref<8x128xf32, #tpu.memory_space<vmem>>, vector<8x128xf32>
    tpu.vector_store %arg7[%c0_12, %c0_13], %11 {strides = array<i32>} : memref<8x128xf32, #tpu.memory_space<vmem>>, vector<8x128xf32>,
    return
  }
  func.func @transform_0(%arg0: i32) -> (i32, i32) {
    %c0_i32 = arith.constant 0 : i32
    %c0_i32_0 = arith.constant 0 : i32
    return %arg0, %c0_i32 : i32, i32
  }
  func.func @transform_1(%arg0: i32) -> (i32, i32) {
    %c0_i32 = arith.constant 0 : i32
    %c0_i32_0 = arith.constant 0 : i32
    %c0_i32_1 = arith.constant 0 : i32
    return %c0_i32, %c0_i32_0 : i32, i32
  }
  func.func @transform_2(%arg0: i32) -> (i32, i32) {
    %c0_i32 = arith.constant 0 : i32
    %c0_i32_0 = arith.constant 0 : i32
    %c0_i32_1 = arith.constant 0 : i32
    return %c0_i32, %c0_i32_0 : i32, i32
  }
  func.func @transform_3(%arg0: i32) -> (i32, i32) {
    %c0_i32 = arith.constant 0 : i32
    %c0_i32_0 = arith.constant 0 : i32
    %c0_i32_1 = arith.constant 0 : i32
    return %c0_i32, %c0_i32_0 : i32, i32
  }
  func.func @transform_4(%arg0: i32) -> (i32, i32) {
    %c0_i32 = arith.constant 0 : i32
    %c0_i32_0 = arith.constant 0 : i32
    %c0_i32_1 = arith.constant 0 : i32
    return %c0_i32, %c0_i32_0 : i32, i32
  }
  func.func @transform_5(%arg0: i32) -> (i32, i32) {
    %c0_i32 = arith.constant 0 : i32
    %c0_i32_0 = arith.constant 0 : i32
    return %arg0, %c0_i32 : i32, i32
  }
  func.func @transform_6(%arg0: i32) -> (i32, i32) {
    %c0_i32 = arith.constant 0 : i32
    %c0_i32_0 = arith.constant 0 : i32
    return %arg0, %c0_i32 : i32, i32
  }
}

</mosaic_0001>

<llo_original>
// kernel: tpu_custom_call.1
$region0: #{tpu_custom_call.1}
  #allocation0 [shape = 'u32[]', space=smem, size = 0x4, offset = 0x4, fixed_abs, tag = 'smem constant byte address 0x4 - core index']
  #allocation1 [shape = 'u32[144,128]{1,0:T(1,128)}', space=vmem, size = 0x12000, scoped, tag = 'internal scratch']
  %s0 = inlined_call_operand.hbm [shape: f32[24,128], index: 0, kind: input, shape index: {}]
  %s1 = inlined_call_operand.hbm [shape: f32[128,128], index: 1, kind: input, shape index: {}]
  %s2 = inlined_call_operand.vmem [shape: f32[1,128], index: 2, kind: input, shape index: {}]
  %s3 = inlined_call_operand.hbm [shape: f32[128,128], index: 3, kind: input, shape index: {}]
  %s4 = inlined_call_operand.vmem [shape: f32[1,128], index: 4, kind: input, shape index: {}]
  %s5 = inlined_call_operand.hbm [shape: f32[24,128], index: 5, kind: output, shape index: {0}]
  %s6 = inlined_call_operand.hbm [shape: f32[24,128], index: 6, kind: output, shape index: {1}]
  %7 = xla_tuple %s5, %s6
  %s8 = sld [smem:[#allocation0]]
  $region73: #{tpu_custom_call.1} parent=0
    _
  %s10 = ssub.s32 1, %s8
  %s11 = scalar_select 0, %s10, %s8
  $region1: #{tpu_custom_call.1} parent=0
    #allocation2 [shape = 'u8[8192]{0}', space=vmem, size = 0x2000, scoped, tag = 'input window, operand 0']
    #allocation3 [shape = 's32[2]{0}', space=sflag, size = 0x8, scoped, tag = 'scoped memory for tpu_custom_call.1']
    #allocation4 [shape = 's32[2]{0}', space=sflag, size = 0x8, scoped, tag = 'scoped memory for tpu_custom_call.1']
    #allocation5 [shape = 'u8[65536]{0}', space=vmem, size = 0x10000, scoped, tag = 'input window, operand 1, single buffered']
    #allocation6 [shape = 's32[1]{0}', space=sflag, size = 0x4, scoped, tag = 'scoped memory for tpu_custom_call.1']
    #allocation7 [shape = 'u8[65536]{0}', space=vmem, size = 0x10000, scoped, tag = 'input window, operand 3, single buffered']
    #allocation8 [shape = 'u8[8192]{0}', space=vmem, size = 0x2000, scoped, tag = 'output window, operand 0']
    #allocation9 [shape = 'u8[8192]{0}', space=vmem, size = 0x2000, scoped, tag = 'output window, operand 1']
    #allocation10 [shape = 's32[2]{0}', space=sflag, size = 0x8, scoped, tag = 'scoped memory for tpu_custom_call.1']
    %12 = vsyncpa [#allocation3], 0
    %s13 = scalar_lea.sflag [#allocation3], 1
    %14 = vsyncpa %s13, 0
    %15 = vsyncpa [#allocation6], 0
    %16 = vsyncpa [#allocation4], 0
    %s17 = scalar_lea.sflag [#allocation4], 1
    %18 = vsyncpa %s17, 0
    %19 = vsyncpa [#allocation10], 0
    %s20 = scalar_lea.sflag [#allocation10], 1
    %21 = vsyncpa %s20, 0
    loop: start=0, step=1, limit=5
    $region2: #{tpu_custom_call.1} parent=1 // loop_pre_header
      _
    $region3: #{tpu_custom_call.1} parent=1 // loop_header
      %s23 = sphi 0, %s27
      %p24 = scmp.ge.s32.totalorder %s23, 5
      %s33 = sphi 0, %s35
      %s36 = sphi 0, %s33
      %s37 = sphi 0, %s36
      %s53 = sphi 0, %s37
      %s57 = sphi 0, %s57
      %s59 = sphi 0, %s57
      %s60 = sphi 0, %s59
      %s74 = sphi 0, %s60
      %s78 = sphi 0, %s78
      %s80 = sphi 0, %s78
      %s81 = sphi 0, %s80
      %s95 = sphi 0, %s81
      %s99 = sphi 0, %s99
      %s101 = sphi 0, %s99
      %s102 = sphi 0, %s101
      %s116 = sphi 0, %s102
      %s120 = sphi 0, %s120
      %s122 = sphi 0, %s120
      %s123 = sphi 0, %s122
      %s137 = sphi 0, %s123
      %s143 = sphi 0, %s145
      %s146 = sphi 0, %s143
      %s147 = sphi 0, %s146
      %s163 = sphi 0, %s147
      %s169 = sphi 0, %s171
      %s172 = sphi 0, %s169
      %s173 = sphi 0, %s172
      %s189 = sphi 0, %s173
    $region4: #{tpu_custom_call.1} parent=1 // loop_header_branch
      %26 = sbr.rel (%p24) target = $region8
    $region5: #{tpu_custom_call.1} parent=1 // loop_body
      %s28 = ssub.s32 %s23, 1
      %s29 = ssub.s32 %s23, 2
      %s30 = sadd.s32 %s23, 1
      %s31 = ssub.s32 %s23, %s30
      %p32 = scmp.eq.s32.totalorder %s31, 0
      %s34 = sadd.s32 %s33, 1
      %s35 = scalar_select %p32, %s33, %s34
      %p38 = pneg %p32
      %p39 = scmp.eq.s32.totalorder %s23, 2
      %p40 = por %p38, %p39
      %p41 = scmp.ne.s32.totalorder %s33, %s36
      %p42 = scmp.eq.s32.totalorder %s23, 0
      %p43 = por %p41, %p42
      %p44 = scmp.ne.s32.totalorder %s33, %s36
      %p45 = scmp.eq.s32.totalorder %s28, 2
      %p46 = por %p44, %p45
      %p47 = scmp.ne.s32.totalorder %s36, %s37
      %p48 = scmp.eq.s32.totalorder %s28, 0
      %p49 = por %p47, %p48
      %p50 = scmp.ne.s32.totalorder %s36, %s37
      %p51 = scmp.eq.s32.totalorder %s29, 2
      %p52 = por %p50, %p51
      %p54 = scmp.ne.s32.totalorder %s37, %s53
      %p55 = scmp.eq.s32.totalorder %s29, 0
      %p56 = por %p54, %p55
      %s58 = sadd.s32 %s57, 1
      %p61 = scmp.eq.s32.totalorder %s23, 2
      %p62 = scmp.ne.s32.totalorder %s57, %s59
      %p63 = scmp.eq.s32.totalorder %s23, 0
      %p64 = por %p62, %p63
      %p65 = scmp.ne.s32.totalorder %s57, %s59
      %p66 = scmp.eq.s32.totalorder %s28, 2
      %p67 = por %p65, %p66
      %p68 = scmp.ne.s32.totalorder %s59, %s60
      %p69 = scmp.eq.s32.totalorder %s28, 0
      %p70 = por %p68, %p69
      %p71 = scmp.ne.s32.totalorder %s59, %s60
      %p72 = scmp.eq.s32.totalorder %s29, 2
      %p73 = por %p71, %p72
      %p75 = scmp.ne.s32.totalorder %s60, %s74
      %p76 = scmp.eq.s32.totalorder %s29, 0
      %p77 = por %p75, %p76
      %s79 = sadd.s32 %s78, 1
      %p82 = scmp.eq.s32.totalorder %s23, 2
      %p83 = scmp.ne.s32.totalorder %s78, %s80
      %p84 = scmp.eq.s32.totalorder %s23, 0
      %p85 = por %p83, %p84
      %p86 = scmp.ne.s32.totalorder %s78, %s80
      %p87 = scmp.eq.s32.totalorder %s28, 2
      %p88 = por %p86, %p87
      %p89 = scmp.ne.s32.totalorder %s80, %s81
      %p90 = scmp.eq.s32.totalorder %s28, 0
      %p91 = por %p89, %p90
      %p92 = scmp.ne.s32.totalorder %s80, %s81
      %p93 = scmp.eq.s32.totalorder %s29, 2
      %p94 = por %p92, %p93
      %p96 = scmp.ne.s32.totalorder %s81, %s95
      %p97 = scmp.eq.s32.totalorder %s29, 0
      %p98 = por %p96, %p97
      %s100 = sadd.s32 %s99, 1
      %p103 = scmp.eq.s32.totalorder %s23, 2
      %p104 = scmp.ne.s32.totalorder %s99, %s101
      %p105 = scmp.eq.s32.totalorder %s23, 0
      %p106 = por %p104, %p105
      %p107 = scmp.ne.s32.totalorder %s99, %s101
      %p108 = scmp.eq.s32.totalorder %s28, 2
      %p109 = por %p107, %p108
      %p110 = scmp.ne.s32.totalorder %s101, %s102
      %p111 = scmp.eq.s32.totalorder %s28, 0
      %p112 = por %p110, %p111
      %p113 = scmp.ne.s32.totalorder %s101, %s102
      %p114 = scmp.eq.s32.totalorder %s29, 2
      %p115 = por %p113, %p114
      %p117 = scmp.ne.s32.totalorder %s102, %s116
      %p118 = scmp.eq.s32.totalorder %s29, 0
      %p119 = por %p117, %p118
      %s121 = sadd.s32 %s120, 1
      %p124 = scmp.eq.s32.totalorder %s23, 2
      %p125 = scmp.ne.s32.totalorder %s120, %s122
      %p126 = scmp.eq.s32.totalorder %s23, 0
      %p127 = por %p125, %p126
      %p128 = scmp.ne.s32.totalorder %s120, %s122
      %p129 = scmp.eq.s32.totalorder %s28, 2
      %p130 = por %p128, %p129
      %p131 = scmp.ne.s32.totalorder %s122, %s123
      %p132 = scmp.eq.s32.totalorder %s28, 0
      %p133 = por %p131, %p132
      %p134 = scmp.ne.s32.totalorder %s122, %s123
      %p135 = scmp.eq.s32.totalorder %s29, 2
      %p136 = por %p134, %p135
      %p138 = scmp.ne.s32.totalorder %s123, %s137
      %p139 = scmp.eq.s32.totalorder %s29, 0
      %p140 = por %p138, %p139
      %s141 = ssub.s32 %s23, %s30
      %p142 = scmp.eq.s32.totalorder %s141, 0
      %s144 = sadd.s32 %s143, 1
      %s145 = scalar_select %p142, %s143, %s144
      %p148 = pneg %p142
      %p149 = scmp.eq.s32.totalorder %s23, 2
      %p150 = por %p148, %p149
      %p151 = scmp.ne.s32.totalorder %s143, %s146
      %p152 = scmp.eq.s32.totalorder %s23, 0
      %p153 = por %p151, %p152
      %p154 = scmp.ne.s32.totalorder %s143, %s146
      %p155 = scmp.eq.s32.totalorder %s28, 2
      %p156 = por %p154, %p155
      %p157 = scmp.ne.s32.totalorder %s146, %s147
      %p158 = scmp.eq.s32.totalorder %s28, 0
      %p159 = por %p157, %p158
      %p160 = scmp.ne.s32.totalorder %s146, %s147
      %p161 = scmp.eq.s32.totalorder %s29, 2
      %p162 = por %p160, %p161
      %p164 = scmp.ne.s32.totalorder %s147, %s163
      %p165 = scmp.eq.s32.totalorder %s29, 0
      %p166 = por %p164, %p165
      %s167 = ssub.s32 %s23, %s30
      %p168 = scmp.eq.s32.totalorder %s167, 0
      %s170 = sadd.s32 %s169, 1
      %s171 = scalar_select %p168, %s169, %s170
      %p174 = pneg %p168
      %p175 = scmp.eq.s32.totalorder %s23, 2
      %p176 = por %p174, %p175
      %p177 = scmp.ne.s32.totalorder %s169, %s172
      %p178 = scmp.eq.s32.totalorder %s23, 0
      %p179 = por %p177, %p178
      %p180 = scmp.ne.s32.totalorder %s169, %s172
      %p181 = scmp.eq.s32.totalorder %s28, 2
      %p182 = por %p180, %p181
      %p183 = scmp.ne.s32.totalorder %s172, %s173
      %p184 = scmp.eq.s32.totalorder %s28, 0
      %p185 = por %p183, %p184
      %p186 = scmp.ne.s32.totalorder %s172, %s173
      %p187 = scmp.eq.s32.totalorder %s29, 2
      %p188 = por %p186, %p187
      %p190 = scmp.ne.s32.totalorder %s173, %s189
      %p191 = scmp.eq.s32.totalorder %s29, 0
      %p192 = por %p190, %p191
      %p193 = scmp.le.s32.totalorder 1, %s23
      %p194 = scmp.lt.s32.totalorder %s23, 4
      %p195 = pnand %p193, %p194
      %p196 = pneg %p195
      // Predicated region
      $region9: #{tpu_custom_call.1} parent=5 // pred_check
        _
      $region10: #{tpu_custom_call.1} parent=5 // pred_check_branch
        %198 = sbr.rel (%p195) target = $region12
      $region11: #{tpu_custom_call.1} parent=5 // pred_region
        %s199 = ssub.s32 %s23, 1
        // Predicated region
        $region13: #{tpu_custom_call.1} parent=11 // pred_check
          %p200 = pneg %p70
        $region14: #{tpu_custom_call.1} parent=11 // pred_check_branch
          %202 = sbr.rel (%p200) target = $region16
        $region15: #{tpu_custom_call.1} parent=11 // pred_region
          %s204 = ssub.s32 2048, 2048
          %205 = vsyncadd [#allocation6], %s204
          %s206 = sshll.u32 [#allocation5], 4
          %s207 = int_to_ptr.vmem [resolvable:$true] %s206
          %212 = dma.hbm_to_vmem [thread:$0]  %s1, 2048, %s207, [#allocation6], 128, 128, 8
        $region16: #{tpu_custom_call.1} parent=11 // pred_fallthru
          _
        // Predicated region
        $region17: #{tpu_custom_call.1} parent=11 // pred_check
          %p213 = pneg %p91
        $region18: #{tpu_custom_call.1} parent=11 // pred_check_branch
          %215 = sbr.rel (%p213) target = $region20
        $region19: #{tpu_custom_call.1} parent=11 // pred_region
          _
        $region20: #{tpu_custom_call.1} parent=11 // pred_fallthru
          _
        // Predicated region
        $region21: #{tpu_custom_call.1} parent=11 // pred_check
          %p216 = pneg %p112
        $region22: #{tpu_custom_call.1} parent=11 // pred_check_branch
          %218 = sbr.rel (%p216) target = $region24
        $region23: #{tpu_custom_call.1} parent=11 // pred_region
          %s220 = ssub.s32 2048, 2048
          %221 = vsyncadd [#allocation6], %s220
          %s222 = sshll.u32 [#allocation7], 4
          %s223 = int_to_ptr.vmem [resolvable:$true] %s222
          %228 = dma.hbm_to_vmem [thread:$0]  %s3, 2048, %s223, [#allocation6], 128, 128, 8
        $region24: #{tpu_custom_call.1} parent=11 // pred_fallthru
          _
        // Predicated region
        $region25: #{tpu_custom_call.1} parent=11 // pred_check
          %p229 = pneg %p133
        $region26: #{tpu_custom_call.1} parent=11 // pred_check_branch
          %231 = sbr.rel (%p229) target = $region28
        $region27: #{tpu_custom_call.1} parent=11 // pred_region
          _
        $region28: #{tpu_custom_call.1} parent=11 // pred_fallthru
          _
      $region12: #{tpu_custom_call.1} parent=5 // pred_fallthru
        _
      %p232 = scmp.lt.s32.totalorder %s23, 3
      // Predicated region
      $region29: #{tpu_custom_call.1} parent=5 // pred_check
        %p233 = pneg %p232
      $region30: #{tpu_custom_call.1} parent=5 // pred_check_branch
        %235 = sbr.rel (%p233) target = $region32
      $region31: #{tpu_custom_call.1} parent=5 // pred_region
        // Predicated region
        $region33: #{tpu_custom_call.1} parent=31 // pred_check
          %p236 = pneg %p43
        $region34: #{tpu_custom_call.1} parent=31 // pred_check_branch
          %238 = sbr.rel (%p236) target = $region36
        $region35: #{tpu_custom_call.1} parent=31 // pred_region
          %s239 = sand.u32 %s33, 1
          %s240 = scalar_lea.sflag [#allocation3], %s239
          %s241 = sand.u32 %s33, 1
          %s242 = smul.addr %s241, 8
          %s243 = scalar_lea.vmem [#allocation2], %s242
          %s245 = ssub.s32 128, 128
          %246 = vsyncadd %s240, %s245
          %s247 = smul.addr %s23, 128
          %s248 = scalar_lea.hbm %s0, %s247
          %s250 = sshll.u32 %s243, 4
          %s251 = int_to_ptr.vmem [resolvable:$true] %s250
          %253 = dma.hbm_to_vmem [thread:$0]  %s248, 128, %s251, %s240
        $region36: #{tpu_custom_call.1} parent=31 // pred_fallthru
          _
      $region32: #{tpu_custom_call.1} parent=5 // pred_fallthru
        _
      %p254 = scmp.le.s32.totalorder 1, %s23
      %p255 = scmp.lt.s32.totalorder %s23, 4
      %p256 = pnand %p254, %p255
      %p257 = pneg %p256
      // Predicated region
      $region37: #{tpu_custom_call.1} parent=5 // pred_check
        _
      $region38: #{tpu_custom_call.1} parent=5 // pred_check_branch
        %259 = sbr.rel (%p256) target = $region40
      $region39: #{tpu_custom_call.1} parent=5 // pred_region
        %s260 = ssub.s32 %s23, 1
        %s261 = sand.u32 %s36, 1
        %s262 = scalar_lea.sflag [#allocation3], %s261
        %s263 = sand.u32 %s36, 1
        %s264 = smul.addr %s263, 8
        %s265 = scalar_lea.vmem [#allocation2], %s264
        // Predicated region
        $region41: #{tpu_custom_call.1} parent=39 // pred_check
          %p266 = pneg %p49
        $region42: #{tpu_custom_call.1} parent=39 // pred_check_branch
          %268 = sbr.rel (%p266) target = $region44
        $region43: #{tpu_custom_call.1} parent=39 // pred_region
          %269 = dma.done %s262, 128
        $region44: #{tpu_custom_call.1} parent=39 // pred_fallthru
          _
        // Predicated region
        $region45: #{tpu_custom_call.1} parent=39 // pred_check
          %p270 = pneg %p70
        $region46: #{tpu_custom_call.1} parent=39 // pred_check_branch
          %272 = sbr.rel (%p270) target = $region48
        $region47: #{tpu_custom_call.1} parent=39 // pred_region
          %273 = dma.done [#allocation6], 2048
        $region48: #{tpu_custom_call.1} parent=39 // pred_fallthru
          _
        // Predicated region
        $region49: #{tpu_custom_call.1} parent=39 // pred_check
          %p274 = pneg %p112
        $region50: #{tpu_custom_call.1} parent=39 // pred_check_branch
          %276 = sbr.rel (%p274) target = $region52
        $region51: #{tpu_custom_call.1} parent=39 // pred_region
          %277 = dma.done [#allocation6], 2048
        $region52: #{tpu_custom_call.1} parent=39 // pred_fallthru
          _
        %s278 = sand.u32 %s36, 1
        %s279 = scalar_lea.sflag [#allocation3], %s278
        %s280 = sand.u32 %s36, 1
        %s281 = smul.addr %s280, 8
        %s282 = scalar_lea.vmem [#allocation2], %s281
        %p283 = pneg %p49
        %p284 = pneg %p46
        %p285 = pneg %p70
        %p286 = pneg %p67
        %p287 = pneg %p91
        %p288 = pneg %p88
        %p289 = pneg %p112
        %p290 = pneg %p109
        %p291 = pneg %p133
        %p292 = pneg %p130
        %p293 = pneg %p159
        %p294 = pneg %p156
        %s295 = sand.u32 %s146, 1
        %s296 = scalar_lea.sflag [#allocation4], %s295
        %s297 = sand.u32 %s146, 1
        %s298 = smul.addr %s297, 8
        %s299 = scalar_lea.vmem [#allocation8], %s298
        %p300 = pneg %p185
        %p301 = pneg %p182
        %s302 = sand.u32 %s172, 1
        %s303 = scalar_lea.sflag [#allocation10], %s302
        %s304 = sand.u32 %s172, 1
        %s305 = smul.addr %s304, 8
        %s306 = scalar_lea.vmem [#allocation9], %s305
        %v307 = vld [vmem:[%s265] sm:$0xff]
        %v308 = vld [vmem:[#allocation5] sm:$0xff]
        %v309 = vld [vmem:[#allocation5 + $0x8] sm:$0xff]
        %v310 = vld [vmem:[#allocation5 + $0x10] sm:$0xff]
        %v311 = vld [vmem:[#allocation5 + $0x18] sm:$0xff]
        %v312 = vld [vmem:[#allocation5 + $0x20] sm:$0xff]
        %v313 = vld [vmem:[#allocation5 + $0x28] sm:$0xff]
        %v314 = vld [vmem:[#allocation5 + $0x30] sm:$0xff]
        %v315 = vld [vmem:[#allocation5 + $0x38] sm:$0xff]
        %v316 = vld [vmem:[#allocation5 + $0x40] sm:$0xff]
        %v317 = vld [vmem:[#allocation5 + $0x48] sm:$0xff]
        %v318 = vld [vmem:[#allocation5 + $0x50] sm:$0xff]
        %v319 = vld [vmem:[#allocation5 + $0x58] sm:$0xff]
        %v320 = vld [vmem:[#allocation5 + $0x60] sm:$0xff]
        %v321 = vld [vmem:[#allocation5 + $0x68] sm:$0xff]
        %v322 = vld [vmem:[#allocation5 + $0x70] sm:$0xff]
        %v323 = vld [vmem:[#allocation5 + $0x78] sm:$0xff]
        %v324 = vld [vmem:[%s2] sm:$0x1]
        %v326 = vlaneseq
        %v327 = vshrl.u32 %v326, 7
        %v328 = vsub.s32 0, %v327
        %v329 = vrot.slane %v324, %v328
        %331 = vmatprep.subr.mxu0 0.0
        %332 = vmatpush1.msra.mxu0 %v308
        %333 = vmatprep.subr.mxu0 0.0
        %334 = vmatpush1.msra.mxu0 %v309
        %335 = vmatprep.subr.mxu0 0.0
        %336 = vmatpush1.msra.mxu0 %v310
        %337 = vmatprep.subr.mxu0 0.0
        %338 = vmatpush1.msra.mxu0 %v311
        %339 = vmatprep.subr.mxu0 0.0
        %340 = vmatpush1.msra.mxu0 %v312
        %341 = vmatprep.subr.mxu0 0.0
        %342 = vmatpush1.msra.mxu0 %v313
        %343 = vmatprep.subr.mxu0 0.0
        %344 = vmatpush1.msra.mxu0 %v314
        %345 = vmatprep.subr.mxu0 0.0
        %346 = vmatpush1.msra.mxu0 %v315
        %347 = vmatprep.subr.mxu0 0.0
        %348 = vmatpush1.msra.mxu0 %v316
        %349 = vmatprep.subr.mxu0 0.0
        %350 = vmatpush1.msra.mxu0 %v317
        %351 = vmatprep.subr.mxu0 0.0
        %352 = vmatpush1.msra.mxu0 %v318
        %353 = vmatprep.subr.mxu0 0.0
        %354 = vmatpush1.msra.mxu0 %v319
        %355 = vmatprep.subr.mxu0 0.0
        %356 = vmatpush1.msra.mxu0 %v320
        %357 = vmatprep.subr.mxu0 0.0
        %358 = vmatpush1.msra.mxu0 %v321
        %359 = vmatprep.subr.mxu0 0.0
        %360 = vmatpush1.msra.mxu0 %v322
        %361 = vmatprep.subr.mxu0 0.0
        %362 = vmatpush1.msra.mxu0 %v323
        %363 = vmatprep.subr.mxu0 0.0
        %364 = vmatpush1.msra.mxu0 0.0
        %365 = vmatprep.subr.mxu0 0.0
        %366 = vmatpush1.msra.mxu0 0.0
        %367 = vmatprep.subr.mxu0 0.0
        %368 = vmatpush1.msra.mxu0 0.0
        %369 = vmatprep.subr.mxu0 0.0
        %370 = vmatpush1.msra.mxu0 0.0
        %371 = vmatprep.subr.mxu0 0.0
        %372 = vmatpush1.msra.mxu0 0.0
        %373 = vmatprep.subr.mxu0 0.0
        %374 = vmatpush1.msra.mxu0 0.0
        %375 = vmatprep.subr.mxu0 0.0
        %376 = vmatpush1.msra.mxu0 0.0
        %377 = vmatprep.subr.mxu0 0.0
        %378 = vmatpush1.msra.mxu0 0.0
        %379 = vmatprep.subr.mxu0 0.0
        %380 = vmatpush1.msra.mxu0 0.0
        %381 = vmatprep.subr.mxu0 0.0
        %382 = vmatpush1.msra.mxu0 0.0
        %383 = vmatprep.subr.mxu0 0.0
        %384 = vmatpush1.msra.mxu0 0.0
        %385 = vmatprep.subr.mxu0 0.0
        %386 = vmatpush1.msra.mxu0 0.0
        %387 = vmatprep.subr.mxu0 0.0
        %388 = vmatpush1.msra.mxu0 0.0
        %389 = vmatprep.subr.mxu0 0.0
        %390 = vmatpush1.msra.mxu0 0.0
        %391 = vmatprep.subr.mxu0 0.0
        %392 = vmatpush1.msra.mxu0 0.0
        %393 = vmatprep.subr.mxu0 0.0
        %394 = vmatpush1.msra.mxu0 0.0
        %395 = vmatprep.mubr.f32.mxu0 0.0
        %396 = vmatmul.mubr.f32.gmra.mrb[0].mxu0 %v307
        %v397 = vpop.f32.mrb[0].mxu0
        %v398 = vadd.f32 %v329, %v397
        %v399 = vpop.f32.mrb[0].mxu0
        %400 = vdwg.mxu0
        %401 = vst [vmem:[%s299] sm:$0xff] %v398
        %v402 = vld [vmem:[#allocation7] sm:$0xff]
        %v403 = vld [vmem:[#allocation7 + $0x8] sm:$0xff]
        %v404 = vld [vmem:[#allocation7 + $0x10] sm:$0xff]
        %v405 = vld [vmem:[#allocation7 + $0x18] sm:$0xff]
        %v406 = vld [vmem:[#allocation7 + $0x20] sm:$0xff]
        %v407 = vld [vmem:[#allocation7 + $0x28] sm:$0xff]
        %v408 = vld [vmem:[#allocation7 + $0x30] sm:$0xff]
        %v409 = vld [vmem:[#allocation7 + $0x38] sm:$0xff]
        %v410 = vld [vmem:[#allocation7 + $0x40] sm:$0xff]
        %v411 = vld [vmem:[#allocation7 + $0x48] sm:$0xff]
        %v412 = vld [vmem:[#allocation7 + $0x50] sm:$0xff]
        %v413 = vld [vmem:[#allocation7 + $0x58] sm:$0xff]
        %v414 = vld [vmem:[#allocation7 + $0x60] sm:$0xff]
        %v415 = vld [vmem:[#allocation7 + $0x68] sm:$0xff]
        %v416 = vld [vmem:[#allocation7 + $0x70] sm:$0xff]
        %v417 = vld [vmem:[#allocation7 + $0x78] sm:$0xff]
        %v418 = vld [vmem:[%s4] sm:$0x1]
        %v420 = vlaneseq
        %v421 = vshrl.u32 %v420, 7
        %v422 = vsub.s32 0, %v421
        %v423 = vrot.slane %v418, %v422
        %425 = vmatprep.subr.mxu0 0.0
        %426 = vmatpush1.msra.mxu0 %v402
        %427 = vmatprep.subr.mxu0 0.0
        %428 = vmatpush1.msra.mxu0 %v403
        %429 = vmatprep.subr.mxu0 0.0
        %430 = vmatpush1.msra.mxu0 %v404
        %431 = vmatprep.subr.mxu0 0.0
        %432 = vmatpush1.msra.mxu0 %v405
        %433 = vmatprep.subr.mxu0 0.0
        %434 = vmatpush1.msra.mxu0 %v406
        %435 = vmatprep.subr.mxu0 0.0
        %436 = vmatpush1.msra.mxu0 %v407
        %437 = vmatprep.subr.mxu0 0.0
        %438 = vmatpush1.msra.mxu0 %v408
        %439 = vmatprep.subr.mxu0 0.0
        %440 = vmatpush1.msra.mxu0 %v409
        %441 = vmatprep.subr.mxu0 0.0
        %442 = vmatpush1.msra.mxu0 %v410
        %443 = vmatprep.subr.mxu0 0.0
        %444 = vmatpush1.msra.mxu0 %v411
        %445 = vmatprep.subr.mxu0 0.0
        %446 = vmatpush1.msra.mxu0 %v412
        %447 = vmatprep.subr.mxu0 0.0
        %448 = vmatpush1.msra.mxu0 %v413
        %449 = vmatprep.subr.mxu0 0.0
        %450 = vmatpush1.msra.mxu0 %v414
        %451 = vmatprep.subr.mxu0 0.0
        %452 = vmatpush1.msra.mxu0 %v415
        %453 = vmatprep.subr.mxu0 0.0
        %454 = vmatpush1.msra.mxu0 %v416
        %455 = vmatprep.subr.mxu0 0.0
        %456 = vmatpush1.msra.mxu0 %v417
        %457 = vmatprep.subr.mxu0 0.0
        %458 = vmatpush1.msra.mxu0 0.0
        %459 = vmatprep.subr.mxu0 0.0
        %460 = vmatpush1.msra.mxu0 0.0
        %461 = vmatprep.subr.mxu0 0.0
        %462 = vmatpush1.msra.mxu0 0.0
        %463 = vmatprep.subr.mxu0 0.0
        %464 = vmatpush1.msra.mxu0 0.0
        %465 = vmatprep.subr.mxu0 0.0
        %466 = vmatpush1.msra.mxu0 0.0
        %467 = vmatprep.subr.mxu0 0.0
        %468 = vmatpush1.msra.mxu0 0.0
        %469 = vmatprep.subr.mxu0 0.0
        %470 = vmatpush1.msra.mxu0 0.0
        %471 = vmatprep.subr.mxu0 0.0
        %472 = vmatpush1.msra.mxu0 0.0
        %473 = vmatprep.subr.mxu0 0.0
        %474 = vmatpush1.msra.mxu0 0.0
        %475 = vmatprep.subr.mxu0 0.0
        %476 = vmatpush1.msra.mxu0 0.0
        %477 = vmatprep.subr.mxu0 0.0
        %478 = vmatpush1.msra.mxu0 0.0
        %479 = vmatprep.subr.mxu0 0.0
        %480 = vmatpush1.msra.mxu0 0.0
        %481 = vmatprep.subr.mxu0 0.0
        %482 = vmatpush1.msra.mxu0 0.0
        %483 = vmatprep.subr.mxu0 0.0
        %484 = vmatpush1.msra.mxu0 0.0
        %485 = vmatprep.subr.mxu0 0.0
        %486 = vmatpush1.msra.mxu0 0.0
        %487 = vmatprep.subr.mxu0 0.0
        %488 = vmatpush1.msra.mxu0 0.0
        %489 = vmatprep.mubr.f32.mxu0 0.0
        %490 = vmatmul.mubr.f32.gmra.mrb[0].mxu0 %v398
        %v491 = vpop.f32.mrb[0].mxu0
        %v492 = vadd.f32 %v423, %v491
        %v493 = vpop.f32.mrb[0].mxu0
        %494 = vdwg.mxu0
        %495 = vst [vmem:[%s306] sm:$0xff] %v492
        %s496 = sand.u32 %s146, 1
        %s497 = scalar_lea.sflag [#allocation4], %s496
        %s498 = sand.u32 %s146, 1
        %s499 = smul.addr %s498, 8
        %s500 = scalar_lea.vmem [#allocation8], %s499
        %s501 = sand.u32 %s172, 1
        %s502 = scalar_lea.sflag [#allocation10], %s501
        %s503 = sand.u32 %s172, 1
        %s504 = smul.addr %s503, 8
        %s505 = scalar_lea.vmem [#allocation9], %s504
        // Predicated region
        $region53: #{tpu_custom_call.1} parent=39 // pred_check
          %p506 = pneg %p156
        $region54: #{tpu_custom_call.1} parent=39 // pred_check_branch
          %508 = sbr.rel (%p506) target = $region56
        $region55: #{tpu_custom_call.1} parent=39 // pred_region
          %s510 = ssub.s32 128, 128
          %511 = vsyncadd %s497, %s510
          %s512 = smul.addr %s28, 128
          %s513 = scalar_lea.hbm %s5, %s512
          %s515 = sshll.u32 %s500, 4
          %s516 = int_to_ptr.vmem [resolvable:$true] %s515
          %518 = dma.vmem_to_hbm [thread:$0]  %s516, 128, %s513, %s497
        $region56: #{tpu_custom_call.1} parent=39 // pred_fallthru
          _
        // Predicated region
        $region57: #{tpu_custom_call.1} parent=39 // pred_check
          %p519 = pneg %p182
        $region58: #{tpu_custom_call.1} parent=39 // pred_check_branch
          %521 = sbr.rel (%p519) target = $region60
        $region59: #{tpu_custom_call.1} parent=39 // pred_region
          %s523 = ssub.s32 128, 128
          %524 = vsyncadd %s502, %s523
          %s525 = smul.addr %s28, 128
          %s526 = scalar_lea.hbm %s6, %s525
          %s528 = sshll.u32 %s505, 4
          %s529 = int_to_ptr.vmem [resolvable:$true] %s528
          %531 = dma.vmem_to_hbm [thread:$0]  %s529, 128, %s526, %s502
        $region60: #{tpu_custom_call.1} parent=39 // pred_fallthru
          _
      $region40: #{tpu_custom_call.1} parent=5 // pred_fallthru
        _
      %p532 = scmp.le.s32.totalorder 2, %s23
      // Predicated region
      $region61: #{tpu_custom_call.1} parent=5 // pred_check
        %p533 = pneg %p532
      $region62: #{tpu_custom_call.1} parent=5 // pred_check_branch
        %535 = sbr.rel (%p533) target = $region64
      $region63: #{tpu_custom_call.1} parent=5 // pred_region
        %s536 = ssub.s32 %s23, 2
        // Predicated region
        $region65: #{tpu_custom_call.1} parent=63 // pred_check
          %p537 = pneg %p162
        $region66: #{tpu_custom_call.1} parent=63 // pred_check_branch
          %539 = sbr.rel (%p537) target = $region68
        $region67: #{tpu_custom_call.1} parent=63 // pred_region
          %s540 = sand.u32 %s147, 1
          %s541 = scalar_lea.sflag [#allocation4], %s540
          %s542 = sand.u32 %s147, 1
          %s543 = smul.addr %s542, 8
          %s544 = scalar_lea.vmem [#allocation8], %s543
          %545 = dma.done %s541, 128
        $region68: #{tpu_custom_call.1} parent=63 // pred_fallthru
          _
        // Predicated region
        $region69: #{tpu_custom_call.1} parent=63 // pred_check
          %p546 = pneg %p188
        $region70: #{tpu_custom_call.1} parent=63 // pred_check_branch
          %548 = sbr.rel (%p546) target = $region72
        $region71: #{tpu_custom_call.1} parent=63 // pred_region
          %s549 = sand.u32 %s173, 1
          %s550 = scalar_lea.sflag [#allocation10], %s549
          %s551 = sand.u32 %s173, 1
          %s552 = smul.addr %s551, 8
          %s553 = scalar_lea.vmem [#allocation9], %s552
          %554 = dma.done %s550, 128
        $region72: #{tpu_custom_call.1} parent=63 // pred_fallthru
          _
      $region64: #{tpu_custom_call.1} parent=5 // pred_fallthru
        _
    $region6: #{tpu_custom_call.1} parent=1 // loop_footer
      %s27 = sadd.s32 1, %s23
    $region7: #{tpu_custom_call.1} parent=1 // loop_footer_branch
      %22 = sbr.rel target = $region3
    $region8: #{tpu_custom_call.1} parent=1 // loop_exit
      _
    %555 = vsyncpa [#allocation3], 1
    %s556 = scalar_lea.sflag [#allocation3], 1
    %557 = vsyncpa %s556, 1
    %558 = vsyncpa [#allocation6], 1
    %559 = vsyncpa [#allocation4], 1
    %s560 = scalar_lea.sflag [#allocation4], 1
    %561 = vsyncpa %s560, 1
    %562 = vsyncpa [#allocation10], 1
    %s563 = scalar_lea.sflag [#allocation10], 1
    %564 = vsyncpa %s563, 1

</llo_original>
